<compile_context>
chip_gen: v5e
topology: v5e:2x2
jax: 0.10.0
libtpu: 0.0.40
codegen_flags: <defaults>
</compile_context>

<pallas_src>
import functools

import jax
import jax.numpy as jnp
from jax.experimental import pallas as pl
from jax.experimental.pallas import tpu as pltpu

IN_FEATURES = 2
OUT_FEATURES = 1


def _bnn_kernel(x_ref, w_ref, out_ref):
    """Reparameterized Bayesian linear layer with the bias folded into the matmul.

    x_ref  : (B_pad, K_pad)      -- column K holds 1.0 (drives the bias row)
    w_ref  : (3, K_pad, O_pad)   -- stacked [mu.T ; rho.T ; eps.T], bias params in row K
    out_ref: (B_pad, O)          -- unpadded output lanes (masked store at this size)
    """
    # softplus(rho) = log(1 + exp(rho)) == logaddexp(rho, 0)  (EUP transcendental slot)
    w_sigma = jnp.logaddexp(w_ref[1], 0.0)               # (K_pad, O_pad)
    weight = w_ref[0] + w_sigma * w_ref[2]               # mu + sigma * eps (bias in row K)

    # Single MXU matmul: (B_pad, K_pad) @ (K_pad, O_pad) -> f32 accumulation.
    acc = jnp.dot(x_ref[...], weight, preferred_element_type=jnp.float32)
    out_ref[...] = acc[:, : out_ref.shape[1]]


def _round_up(n, m):
    return ((n + m - 1) // m) * m


@functools.partial(jax.jit, static_argnames=())
def bayesian_linear_forward(x, weight_mu, weight_rho, bias_mu, bias_rho,
                            weight_eps, bias_eps):
    """Pallas-backed forward of BayesianLinear.

    Returns (output, (weight_mu, weight_sigma), (bias_mu, bias_sigma)),
    mirroring torch's (output, Normal(w_mu, softplus(w_rho)),
    Normal(b_mu, softplus(b_rho))).
    """
    B, K = x.shape
    O = weight_mu.shape[0]

    B_pad = max(8, _round_up(B, 8))
    K_pad = max(8, _round_up(K + 1, 8))      # +1 row for the folded bias
    O_pad = max(128, _round_up(O, 128))      # lane-dense weight operand

    # Stacked, transposed, padded, bias-augmented weight slab in one buffer.
    # Zero padding is exact: padded eps entries are 0, so sigma*eps = 0 there,
    # and x's padded columns are 0 as well.
    w_p = jnp.zeros((3, K_pad, O_pad), jnp.float32)
    w_p = w_p.at[:, :K, :O].set(
        jnp.stack([weight_mu, weight_rho, weight_eps]).transpose(0, 2, 1))
    w_p = w_p.at[:, K, :O].set(jnp.stack([bias_mu, bias_rho, bias_eps]))

    # Padded x with a ones column at index K (selects the folded bias row).
    x_p = (jnp.zeros((B_pad, K_pad), jnp.float32)
           .at[:B, :K].set(x)
           .at[:B, K].set(1.0))

    vmem = pl.BlockSpec(memory_space=pltpu.MemorySpace.VMEM)

    out_p = pl.pallas_call(
        _bnn_kernel,
        out_shape=jax.ShapeDtypeStruct((B_pad, O), jnp.float32),
        in_specs=[vmem, vmem],
        out_specs=vmem,
    )(x_p, w_p)

    # B == B_pad in the common case (batch multiple of 8): no post-kernel slice.
    output = out_p if B == B_pad else out_p[:B]

    # Posterior Normal scale params on the tiny unpadded arrays (wrapper-side).
    weight_sigma = jax.nn.softplus(weight_rho)
    bias_sigma = jax.nn.softplus(bias_rho)

    # TODO(synk): if batch/features grow, add a parallel batch grid axis
    # (256-aligned tiles, dimension_semantics=("parallel",)) and re-derive the
    # VMEM budget for v7x's 64 MiB; optionally bf16 the matmul operands.
    return output, (weight_mu, weight_sigma), (bias_mu, bias_sigma)


if __name__ == "__main__":
    key = jax.random.PRNGKey(0)
    k_x, k_wmu, k_wrho, k_bmu, k_brho, k_weps, k_beps = jax.random.split(key, 7)

    batch = 8
    # Deterministic "randn" initialization matching the torch module's shapes.
    x = jax.random.normal(k_x, (batch, IN_FEATURES), dtype=jnp.float32)
    weight_mu = jax.random.normal(k_wmu, (OUT_FEATURES, IN_FEATURES), dtype=jnp.float32)
    weight_rho = jax.random.normal(k_wrho, (OUT_FEATURES, IN_FEATURES), dtype=jnp.float32)
    bias_mu = jax.random.normal(k_bmu, (OUT_FEATURES,), dtype=jnp.float32)
    bias_rho = jax.random.normal(k_brho, (OUT_FEATURES,), dtype=jnp.float32)

    # The forward pass samples fresh epsilons each call (reparameterization);
    # they are passed in explicitly so the kernel stays deterministic/testable.
    weight_eps = jax.random.normal(k_weps, (OUT_FEATURES, IN_FEATURES), dtype=jnp.float32)
    bias_eps = jax.random.normal(k_beps, (OUT_FEATURES,), dtype=jnp.float32)

    output, (w_mu, w_sigma), (b_mu, b_sigma) = bayesian_linear_forward(
        x, weight_mu, weight_rho, bias_mu, bias_rho, weight_eps, bias_eps)
    jax.block_until_ready((output, w_sigma, b_sigma))

    # Pure-JAX reference check (same epsilons).
    w_ref = weight_mu + jax.nn.softplus(weight_rho) * weight_eps
    b_ref = bias_mu + jax.nn.softplus(bias_rho) * bias_eps
    out_ref = x @ w_ref.T + b_ref
    assert output.shape == (batch, OUT_FEATURES)
    assert jnp.allclose(output, out_ref, atol=1e-5, rtol=1e-5)
    assert jnp.allclose(w_sigma, jax.nn.softplus(weight_rho), atol=1e-6)
    assert jnp.allclose(b_sigma, jax.nn.softplus(bias_rho), atol=1e-6)

    print("KERNEL_OK")
</pallas_src>

<mosaic_0001>
module attributes {stable_mosaic.version = 11 : i64} {
  func.func @_bnn_kernel(%arg0: memref<8x8xf32, #tpu.memory_space<vmem>>, %arg1: memref<3x8x128xf32, #tpu.memory_space<vmem>>, %arg2: memref<8x1xf32, #tpu.memory_space<vmem>>) attributes {dimension_semantics = [], scalar_prefetch = 0 : i64, scratch_operands = 0 : i64, tpu.core_type = #tpu.core_type<tc>} {
    %c1 = arith.constant 1 : index
    %c0 = arith.constant 0 : index
    %c0_0 = arith.constant 0 : index
    %0 = vector.load %arg1[%c1, %c0, %c0_0] : memref<3x8x128xf32, #tpu.memory_space<vmem>>, vector<1x8x128xf32>
    %1 = vector.shape_cast %0 : vector<1x8x128xf32> to vector<8x128xf32>
    %cst = arith.constant 0.000000e+00 : f32
    %2 = vector.broadcast %cst : f32 to vector<8x128xf32>
    %3 = arith.maximumf %1, %2 : vector<8x128xf32>
    %4 = vector.broadcast %cst : f32 to vector<8x128xf32>
    %5 = arith.subf %1, %4 : vector<8x128xf32>
    %6 = arith.cmpf one, %5, %5 : vector<8x128xf32>
    %7 = vector.broadcast %cst : f32 to vector<8x128xf32>
    %8 = arith.addf %1, %7 : vector<8x128xf32>
    %9 = math.absf %5 : vector<8x128xf32>
    %cst_1 = arith.constant 0.000000e+00 : f32
    %10 = vector.broadcast %cst_1 : f32 to vector<8x128xf32>
    %11 = arith.subf %10, %9 : vector<8x128xf32>
    %12 = math.exp %11 : vector<8x128xf32>
    %13 = math.log1p %12 : vector<8x128xf32>
    %14 = arith.addf %3, %13 : vector<8x128xf32>
    %15 = arith.select %6, %8, %14 : vector<8x128xi1>, vector<8x128xf32>
    %c0_2 = arith.constant 0 : index
    %c0_3 = arith.constant 0 : index
    %c0_4 = arith.constant 0 : index
    %16 = vector.load %arg1[%c0_2, %c0_3, %c0_4] : memref<3x8x128xf32, #tpu.memory_space<vmem>>, vector<1x8x128xf32>
    %17 = vector.shape_cast %16 : vector<1x8x128xf32> to vector<8x128xf32>
    %c2 = arith.constant 2 : index
    %c0_5 = arith.constant 0 : index
    %c0_6 = arith.constant 0 : index
    %18 = vector.load %arg1[%c2, %c0_5, %c0_6] : memref<3x8x128xf32, #tpu.memory_space<vmem>>, vector<1x8x128xf32>
    %19 = vector.shape_cast %18 : vector<1x8x128xf32> to vector<8x128xf32>
    %20 = arith.mulf %15, %19 : vector<8x128xf32>
    %21 = arith.addf %17, %20 : vector<8x128xf32>
    %c0_7 = arith.constant 0 : index
    %c0_8 = arith.constant 0 : index
    %22 = vector.load %arg0[%c0_7, %c0_8] : memref<8x8xf32, #tpu.memory_space<vmem>>, vector<8x8xf32>
    %cst_9 = arith.constant dense<0.000000e+00> : vector<8x128xf32>
    %23 = tpu.matmul %22, %21, %cst_9 {dimension_numbers = #tpu.dot_dimension_numbers<[1], [0], [0], [1], [0, 0, 1, 1], [], []>} : vector<8x8xf32>, vector<8x128xf32>, vector<8x128xf32> -> vector<8x128xf32>
    %24 = vector.extract_strided_slice %23 {offsets = [0, 0], sizes = [8, 1], strides = [1, 1]} : vector<8x128xf32> to vector<8x1xf32>
    %c0_10 = arith.constant 0 : index
    %c0_11 = arith.constant 0 : index
    %25 = vector.load %arg2[%c0_10, %c0_11] : memref<8x1xf32, #tpu.memory_space<vmem>>, vector<8x1xf32>
    tpu.vector_store %arg2[%c0_10, %c0_11], %24 {strides = array<i32>} : memref<8x1xf32, #tpu.memory_space<vmem>>, vector<8x1xf32>,
    return
  }
}

</mosaic_0001>

<llo_original>
// kernel: bayesian_linear_forward.1
$region0: #{bayesian_linear_forward.1}
  #allocation0 [shape = 'u32[]', space=smem, size = 0x4, offset = 0x4, fixed_abs, tag = 'smem constant byte address 0x4 - core index']
  #allocation1 [shape = 'u32[72,128]{1,0:T(1,128)}', space=vmem, size = 0x9000, scoped, tag = 'internal scratch']
  %s0 = inlined_call_operand.vmem [shape: f32[8,8], index: 0, kind: input, shape index: {}]
  %s1 = inlined_call_operand.vmem [shape: f32[3,8,128], index: 1, kind: input, shape index: {}]
  %s2 = inlined_call_operand.vmem [shape: f32[8,1], index: 2, kind: output, shape index: {}]
  %s3 = sld [smem:[#allocation0]]
  $region18: #{bayesian_linear_forward.1} parent=0
    _
  %s5 = ssub.s32 1, %s3
  %s6 = scalar_select 0, %s5, %s3
  // Predicated region
  $region2: #{bayesian_linear_forward.1} parent=0 // pred_check
    _
  $region3: #{bayesian_linear_forward.1} parent=0 // pred_check_branch
    %8 = sbr.rel (0) target = $region5
  $region4: #{bayesian_linear_forward.1} parent=0 // pred_region
    _
  $region5: #{bayesian_linear_forward.1} parent=0 // pred_fallthru
    _
  // Predicated region
  $region6: #{bayesian_linear_forward.1} parent=0 // pred_check
    _
  $region7: #{bayesian_linear_forward.1} parent=0 // pred_check_branch
    %10 = sbr.rel (0) target = $region9
  $region8: #{bayesian_linear_forward.1} parent=0 // pred_region
    _
  $region9: #{bayesian_linear_forward.1} parent=0 // pred_fallthru
    _
  %s11 = scalar_lea.vmem %s1, 8
  %v12 = vld [vmem:[%s11] sm:$0xff]
  %v13 = vmax.f32 %v12, 0.0
  %vm14 = vcmp.ne.f32.partialorder %v12, %v12
  %v15 = vadd.f32 %v12, 0.0
  %v16 = vand.u32 2147483647, %v12
  %v17 = vsub.f32 0.0, %v16
  %v18 = vmul.f32 %v17, 1.442695
  %v19 = vpow.pop %v18
  %v20 = vadd.f32 %v19, 1.0
  %v21 = vlog2.pop %v20
  %v22 = vmul.f32 %v21, 0.6931472
  %v23 = vmul.f32 -0.5, %v19
  %v24 = vadd.f32 %v23, 1.0
  %v25 = vmul.f32 %v24, %v19
  %v26 = vand.u32 2147483647, %v19
  %vm27 = vcmp.lt.f32.partialorder %v26, 0.0004427343
  %v28 = vsel %vm27, %v25, %v22
  %v29 = vadd.f32 %v13, %v28
  %v30 = vsel %vm14, %v15, %v29
  %v31 = vld [vmem:[%s1] sm:$0xff]
  %s32 = scalar_lea.vmem %s1, 16
  %v33 = vld [vmem:[%s32] sm:$0xff]
  %v34 = vmul.f32 %v30, %v33
  %v35 = vadd.f32 %v31, %v34
  %v36 = vld [vmem:[%s0] sm:$0xff]
  %vm37 = vcmask 64512
  %v39 = vsel %vm37, %v36, 0
  %41 = vmatpush.msra.mxu0 0.0
  %42 = vmatpush.msra.mxu0 0.0
  %43 = vmatpush.msra.mxu0 0.0
  %44 = vmatpush.msra.mxu0 0.0
  %45 = vmatpush.msra.mxu0 0.0
  %46 = vmatpush.msra.mxu0 0.0
  %47 = vmatpush.msra.mxu0 0.0
  %48 = vmatpush.msra.mxu0 0.0
  %49 = vmatpush.msra.mxu0 0.0
  %50 = vmatpush.msra.mxu0 0.0
  %51 = vmatpush.msra.mxu0 0.0
  %52 = vmatpush.msra.mxu0 0.0
  %53 = vmatpush.msra.mxu0 0.0
  %54 = vmatpush.msra.mxu0 0.0
  %55 = vmatpush.msra.mxu0 0.0
  %56 = vmatpush.msra.mxu0 %v35
  %57 = vmatmul.f32.gmra.mxu0 %v39
  %v58 = vpop.f32.mrf.mxu0
  %v59 = vadd.f32 0.0, %v58
  %60 = vdwg.mxu0
  %vm61 = vcmask 7168
  %62 = vst.msk [vmem:[%s2] sm:$0xff] %vm61, %v59
  // Predicated region
  $region10: #{bayesian_linear_forward.1} parent=0 // pred_check
    _
  $region11: #{bayesian_linear_forward.1} parent=0 // pred_check_branch
    %64 = sbr.rel (0) target = $region13
  $region12: #{bayesian_linear_forward.1} parent=0 // pred_region
    _
  $region13: #{bayesian_linear_forward.1} parent=0 // pred_fallthru
    _
  // Predicated region
  $region14: #{bayesian_linear_forward.1} parent=0 // pred_check
    _
  $region15: #{bayesian_linear_forward.1} parent=0 // pred_check_branch
    %66 = sbr.rel (0) target = $region17
  $region16: #{bayesian_linear_forward.1} parent=0 // pred_region
    _
  $region17: #{bayesian_linear_forward.1} parent=0 // pred_fallthru
    _

</llo_original>
